<compile_context>
chip_gen: v7x
topology: tpu7x:2x2x1
jax: 0.10.0
libtpu: 0.0.40
codegen_flags: <defaults>
</compile_context>

<pallas_src>
import jax
import jax.numpy as jnp
from jax.experimental import pallas as pl
from jax.experimental.pallas import tpu as pltpu

EPS = 1e-5  # nn.LayerNorm default


def _patch_expand_kernel(x_ref, w_ref, sel_ref, seltg_ref, beta4_ref, o_ref):
    """One row-tile per grid step.

    x_ref:     (TL, H)   input rows (B and L flattened in the wrapper)
    w_ref:     (H, 2H)   expand weight, pre-transposed once in the wrapper
    sel_ref:   (2H, 4)   f32 chunk indicator (col j belongs to chunk j // (H//2))
    seltg_ref: (4, 2H)   transposed indicator with LayerNorm gamma folded in
    beta4_ref: (1, 2H)   LayerNorm beta tiled over the 4 chunks
    o_ref:     (TL, 2H)  lane-dense output (reshaped to (B, 4L, H//2) outside)
    """
    H2 = o_ref.shape[-1]
    inv_dh = 4.0 / H2  # 1 / (H // 2)

    x = x_ref[...]                                               # (TL, H)
    w = w_ref[...]                                               # (H, 2H)

    # Hot path 1: expand matmul on the MXU, f32 accumulation.
    y = jnp.dot(x, w, preferred_element_type=jnp.float32)       # (TL, 2H)

    # Hot path 2: per-chunk LayerNorm.  Chunk h of the expanded features
    # becomes output row l*4 + h after the wrapper reshape, so normalize each
    # of the 4 contiguous H//2-column chunks.  Stats via indicator matmuls
    # (MXU slack) keep everything on full-width (TL, 2H) vregs and avoid
    # sub-128-lane slices when H//2 is not a multiple of 128.
    sel = sel_ref[...]                                           # (2H, 4)
    seltg = seltg_ref[...]                                       # (4, 2H), gamma folded
    beta4 = beta4_ref[...]                                       # (1, 2H)

    mean4 = jnp.dot(y, sel, preferred_element_type=jnp.float32) * inv_dh      # (TL, 4)
    ex2_4 = jnp.dot(y * y, sel, preferred_element_type=jnp.float32) * inv_dh  # (TL, 4)
    # Single-pass variance E[x^2] - mean^2 in f32 (adequate for activations).
    var4 = ex2_4 - mean4 * mean4
    inv4 = jax.lax.rsqrt(var4 + EPS)                             # (TL, 4), EUP

    scale = jnp.dot(inv4, seltg, preferred_element_type=jnp.float32)            # (TL, 2H)
    shift = jnp.dot(-mean4 * inv4, seltg, preferred_element_type=jnp.float32) + beta4

    o_ref[...] = (y * scale + shift).astype(o_ref.dtype)         # one lane-dense store


def _invariant_spec(shape):
    """BlockSpec for a grid-invariant input: constant index_map, single buffer."""
    index_map = lambda *_: (0,) * len(shape)
    if hasattr(pl, "Buffered"):
        try:
            return pl.BlockSpec(shape, index_map, pipeline_mode=pl.Buffered(1))
        except TypeError:
            pass
    return pl.BlockSpec(shape, index_map)


def _vmem_capacity_bytes():
    try:
        return int(pltpu.get_tpu_info().vmem_capacity_bytes)
    except Exception:
        return 64 * 2 ** 20  # conservative: v7x per-TensorCore VMEM


def _pick_tile(n_rows, h, h2, isz, tile_l):
    """Largest sublane-aligned row tile that fits the scoped-VMEM budget."""
    vmem_cap = _vmem_capacity_bytes()
    # Scoped-VMEM ceiling: tighter on v7x (64 MiB physical) than v5e/v6e (128 MiB).
    cap = 40 * 2 ** 20 if vmem_cap <= 80 * 2 ** 20 else 64 * 2 ** 20
    budget = int(cap * 0.9)
    # Grid-invariant blocks (weight + stat constants); budget for double
    # buffering in case single-buffering is not honored.
    fixed = 2 * h * h2 * isz + 2 * (h2 * 4 + 4 * h2 + h2) * 4
    # Per-row cost: double-buffered x / out tiles + ~4 full-width f32 temporaries.
    per_row = 2 * h * isz + 2 * h2 * isz + 4 * h2 * 4
    tl_fit = max(8, ((budget - fixed) // per_row) // 8 * 8)
    tl = min(tile_l, tl_fit)
    if tl >= n_rows:
        tl = n_rows                       # block covers the whole (small) array
    else:
        tl = max(8, (tl // 8) * 8)        # sublane-aligned
    return tl, cap


def patch_expand(x, w_expand, gamma, beta, *, tile_l=1024, compute_dtype=None):
    """PatchExpand forward.

    x: (B, L, H); w_expand: (2H, H) [PyTorch nn.Linear layout]; gamma/beta: (H//2,).
    compute_dtype: optional dtype (e.g. jnp.bfloat16) for the memory-bound data
    path (input / weight / output).  MXU accumulation and LayerNorm math stay f32.
    Returns (B, 4L, H//2).
    """
    B, L, H = x.shape
    assert H % 2 == 0, "hidden_dim must be even"
    H2 = 2 * H
    Dh = H // 2

    w_expand = jnp.asarray(w_expand)
    if compute_dtype is not None:
        x = x.astype(compute_dtype)
        w_expand = w_expand.astype(compute_dtype)
    out_dtype = x.dtype
    isz = jnp.dtype(out_dtype).itemsize

    # Flatten (B, L) -> rows: full-sized, lane/sublane-aligned tiles regardless
    # of how batch vs. sequence split (late Swin stages have tiny L).
    N = B * L
    x2 = x.reshape(N, H)
    # One-time transpose to (H, 2H): MXU sees a plain (TL,H)@(H,2H) product.
    w_t = w_expand.T

    TL, scoped_cap = _pick_tile(N, H, H2, isz, tile_l)
    grid = (pl.cdiv(N, TL),)

    # Chunk-indicator matrices for per-chunk LayerNorm stats.
    col_chunk = jnp.arange(H2, dtype=jnp.int32) // Dh                     # (2H,)
    chunks = jnp.arange(4, dtype=jnp.int32)                               # (4,)
    sel = (col_chunk[:, None] == chunks[None, :]).astype(jnp.float32)     # (2H, 4)
    gamma4 = jnp.tile(jnp.asarray(gamma, jnp.float32), 4).reshape(1, H2)  # (1, 2H)
    beta4 = jnp.tile(jnp.asarray(beta, jnp.float32), 4).reshape(1, H2)    # (1, 2H)
    # Fold gamma into the broadcast matrix: inv4 @ seltg already carries gamma.
    seltg = (chunks[:, None] == col_chunk[None, :]).astype(jnp.float32) * gamma4  # (4, 2H)

    # VMEM estimate: double-buffered x/out tiles, (worst-case double-buffered)
    # invariants, f32 intermediates; headroom, capped per generation.
    est = (2 * TL * H * isz + 2 * TL * H2 * isz
           + 2 * H * H2 * isz + 2 * (H2 * 4 + 4 * H2 + H2) * 4
           + 4 * TL * H2 * 4)
    vmem_limit = int(min(max(est * 5 // 4, 32 * 2 ** 20), scoped_cap))

    cost = pl.CostEstimate(
        flops=2 * N * H * H2,
        transcendentals=0,
        bytes_accessed=N * H * isz + H * H2 * isz + N * H2 * isz,
    )

    out = pl.pallas_call(
        _patch_expand_kernel,
        out_shape=jax.ShapeDtypeStruct((N, H2), out_dtype),
        grid_spec=pltpu.PrefetchScalarGridSpec(
            num_scalar_prefetch=0,
            grid=grid,
            in_specs=[
                pl.BlockSpec((TL, H), lambda i: (i, 0)),
                _invariant_spec((H, H2)),
                _invariant_spec((H2, 4)),
                _invariant_spec((4, H2)),
                _invariant_spec((1, H2)),
            ],
            out_specs=pl.BlockSpec((TL, H2), lambda i: (i, 0)),
        ),
        compiler_params=pltpu.CompilerParams(
            dimension_semantics=("parallel",),
            vmem_limit_bytes=vmem_limit,
        ),
        cost_estimate=cost,
    )(x2, w_t, sel, seltg, beta4)

    # (N, 2H) row-major == (B, L, 2H) -> 'b l (h c) -> b (l h) c' is exactly
    # this reshape (output row = l*4 + h).
    return out.reshape(B, 4 * L, Dh)


def _reference(x, w_expand, gamma, beta):
    """Pure-JAX reference mirroring the PyTorch module."""
    B, L, H = x.shape
    y = jnp.einsum("blh,oh->blo", x, w_expand)          # Linear, no bias
    y = y.reshape(B, 4 * L, H // 2)                     # 'b l (h c) -> b (l h) c'
    mean = jnp.mean(y, axis=-1, keepdims=True)
    var = jnp.mean((y - mean) ** 2, axis=-1, keepdims=True)
    return (y - mean) * jax.lax.rsqrt(var + EPS) * gamma + beta


if __name__ == "__main__":
    # --- Test 1: small module-default shapes, f32, single grid step. ---------
    B, L, HIDDEN = 2, 8, 32
    k1, k2, k3, k4 = jax.random.split(jax.random.PRNGKey(0), 4)
    x = jax.random.normal(k1, (B, L, HIDDEN), dtype=jnp.float32)
    # nn.Linear(hidden, 2*hidden, bias=False) weight: (2*hidden, hidden)
    w = jax.random.normal(k2, (2 * HIDDEN, HIDDEN), dtype=jnp.float32) * 0.05
    gamma = 1.0 + 0.1 * jax.random.normal(k3, (HIDDEN // 2,), dtype=jnp.float32)
    beta = 0.1 * jax.random.normal(k4, (HIDDEN // 2,), dtype=jnp.float32)

    ref = _reference(x, w, gamma, beta)
    out = jax.block_until_ready(patch_expand(x, w, gamma, beta))
    assert out.shape == (B, 4 * L, HIDDEN // 2), out.shape
    assert jnp.allclose(out, ref, atol=1e-4, rtol=1e-4), "f32 mismatch (test 1)"

    # --- Test 2: full-lane H, B*L not divisible by the tile -> partial last
    #     block (exercises masked tail rows and the multi-step pipeline). ----
    B2, L2, H2IN = 2, 49, 128
    k5, k6, k7, k8 = jax.random.split(jax.random.PRNGKey(1), 4)
    x2 = jax.random.normal(k5, (B2, L2, H2IN), dtype=jnp.float32)
    w2 = jax.random.normal(k6, (2 * H2IN, H2IN), dtype=jnp.float32) * 0.05
    gamma2 = 1.0 + 0.1 * jax.random.normal(k7, (H2IN // 2,), dtype=jnp.float32)
    beta2 = 0.1 * jax.random.normal(k8, (H2IN // 2,), dtype=jnp.float32)

    ref2 = _reference(x2, w2, gamma2, beta2)
    out2 = jax.block_until_ready(patch_expand(x2, w2, gamma2, beta2, tile_l=32))
    assert out2.shape == (B2, 4 * L2, H2IN // 2), out2.shape
    assert bool(jnp.isfinite(out2).all()), "NaN/Inf leaked from padded tail rows"
    assert jnp.allclose(out2, ref2, atol=1e-4, rtol=1e-4), "f32 mismatch (test 2)"

    # --- Test 3: bf16 data path (memory-bound fast path), looser tolerance. --
    out3 = jax.block_until_ready(
        patch_expand(x2, w2, gamma2, beta2, tile_l=32, compute_dtype=jnp.bfloat16))
    assert out3.dtype == jnp.bfloat16
    assert jnp.allclose(out3.astype(jnp.float32), ref2, atol=5e-2, rtol=5e-2), \
        "bf16 mismatch (test 3)"

    print("KERNEL_OK")
</pallas_src>

<mosaic_0001>
module attributes {stable_mosaic.version = 11 : i64} {
  func.func @_patch_expand_kernel(%arg0: i32, %arg1: memref<16x32xf32, #tpu.memory_space<vmem>>, %arg2: memref<32x64xf32, #tpu.memory_space<vmem>>, %arg3: memref<64x4xf32, #tpu.memory_space<vmem>>, %arg4: memref<4x64xf32, #tpu.memory_space<vmem>>, %arg5: memref<1x64xf32, #tpu.memory_space<vmem>>, %arg6: memref<16x64xf32, #tpu.memory_space<vmem>>) attributes {dimension_semantics = [#tpu.dimension_semantics<parallel>], iteration_bounds = array<i64: 1>, scalar_prefetch = 0 : i64, scratch_operands = 0 : i64, tpu.core_type = #tpu.core_type<tc>, window_params = [{transform_indices = @transform_0, window_bounds = array<i64: 16, 32>}, {pipeline_mode = #tpu.pipeline_mode<synchronous>, transform_indices = @transform_1, window_bounds = array<i64: 32, 64>}, {pipeline_mode = #tpu.pipeline_mode<synchronous>, transform_indices = @transform_2, window_bounds = array<i64: 64, 4>}, {pipeline_mode = #tpu.pipeline_mode<synchronous>, transform_indices = @transform_3, window_bounds = array<i64: 4, 64>}, {pipeline_mode = #tpu.pipeline_mode<synchronous>, transform_indices = @transform_4, window_bounds = array<i64: 1, 64>}, {transform_indices = @transform_5, window_bounds = array<i64: 16, 64>}]} {
    %c0 = arith.constant 0 : index
    %c0_0 = arith.constant 0 : index
    %0 = vector.load %arg1[%c0, %c0_0] : memref<16x32xf32, #tpu.memory_space<vmem>>, vector<16x32xf32>
    %c0_1 = arith.constant 0 : index
    %c0_2 = arith.constant 0 : index
    %1 = vector.load %arg2[%c0_1, %c0_2] : memref<32x64xf32, #tpu.memory_space<vmem>>, vector<32x64xf32>
    %cst = arith.constant dense<0.000000e+00> : vector<16x64xf32>
    %2 = tpu.matmul %0, %1, %cst {dimension_numbers = #tpu.dot_dimension_numbers<[1], [0], [0], [1], [0, 0, 1, 1], [], []>} : vector<16x32xf32>, vector<32x64xf32>, vector<16x64xf32> -> vector<16x64xf32>
    %c0_3 = arith.constant 0 : index
    %c0_4 = arith.constant 0 : index
    %3 = vector.load %arg3[%c0_3, %c0_4] : memref<64x4xf32, #tpu.memory_space<vmem>>, vector<64x4xf32>
    %c0_5 = arith.constant 0 : index
    %c0_6 = arith.constant 0 : index
    %4 = vector.load %arg4[%c0_5, %c0_6] : memref<4x64xf32, #tpu.memory_space<vmem>>, vector<4x64xf32>
    %c0_7 = arith.constant 0 : index
    %c0_8 = arith.constant 0 : index
    %5 = vector.load %arg5[%c0_7, %c0_8] : memref<1x64xf32, #tpu.memory_space<vmem>>, vector<1x64xf32>
    %cst_9 = arith.constant dense<0.000000e+00> : vector<16x4xf32>
    %6 = tpu.matmul %2, %3, %cst_9 {dimension_numbers = #tpu.dot_dimension_numbers<[1], [0], [0], [1], [0, 0, 1, 1], [], []>} : vector<16x64xf32>, vector<64x4xf32>, vector<16x4xf32> -> vector<16x4xf32>
    %cst_10 = arith.constant 6.250000e-02 : f32
    %7 = vector.broadcast %cst_10 : f32 to vector<16x4xf32>
    %8 = arith.mulf %6, %7 : vector<16x4xf32>
    %9 = arith.mulf %2, %2 : vector<16x64xf32>
    %cst_11 = arith.constant dense<0.000000e+00> : vector<16x4xf32>
    %10 = tpu.matmul %9, %3, %cst_11 {dimension_numbers = #tpu.dot_dimension_numbers<[1], [0], [0], [1], [0, 0, 1, 1], [], []>} : vector<16x64xf32>, vector<64x4xf32>, vector<16x4xf32> -> vector<16x4xf32>
    %cst_12 = arith.constant 6.250000e-02 : f32
    %11 = vector.broadcast %cst_12 : f32 to vector<16x4xf32>
    %12 = arith.mulf %10, %11 : vector<16x4xf32>
    %13 = arith.mulf %8, %8 : vector<16x4xf32>
    %14 = arith.subf %12, %13 : vector<16x4xf32>
    %cst_13 = arith.constant 9.99999974E-6 : f32
    %15 = vector.broadcast %cst_13 : f32 to vector<16x4xf32>
    %16 = arith.addf %14, %15 : vector<16x4xf32>
    %17 = math.rsqrt %16 : vector<16x4xf32>
    %cst_14 = arith.constant dense<0.000000e+00> : vector<16x64xf32>
    %18 = tpu.matmul %17, %4, %cst_14 {dimension_numbers = #tpu.dot_dimension_numbers<[1], [0], [0], [1], [0, 0, 1, 1], [], []>} : vector<16x4xf32>, vector<4x64xf32>, vector<16x64xf32> -> vector<16x64xf32>
    %cst_15 = arith.constant 0.000000e+00 : f32
    %19 = vector.broadcast %cst_15 : f32 to vector<16x4xf32>
    %20 = arith.subf %19, %8 : vector<16x4xf32>
    %21 = arith.mulf %20, %17 : vector<16x4xf32>
    %cst_16 = arith.constant dense<0.000000e+00> : vector<16x64xf32>
    %22 = tpu.matmul %21, %4, %cst_16 {dimension_numbers = #tpu.dot_dimension_numbers<[1], [0], [0], [1], [0, 0, 1, 1], [], []>} : vector<16x4xf32>, vector<4x64xf32>, vector<16x64xf32> -> vector<16x64xf32>
    %23 = vector.broadcast %5 : vector<1x64xf32> to vector<16x64xf32>
    %24 = arith.addf %22, %23 : vector<16x64xf32>
    %25 = arith.mulf %2, %18 : vector<16x64xf32>
    %26 = arith.addf %25, %24 : vector<16x64xf32>
    %c0_17 = arith.constant 0 : index
    %c0_18 = arith.constant 0 : index
    %27 = vector.load %arg6[%c0_17, %c0_18] : memref<16x64xf32, #tpu.memory_space<vmem>>, vector<16x64xf32>
    tpu.vector_store %arg6[%c0_17, %c0_18], %26 {strides = array<i32>} : memref<16x64xf32, #tpu.memory_space<vmem>>, vector<16x64xf32>,
    return
  }
  func.func @transform_0(%arg0: i32) -> (i32, i32) {
    %c0_i32 = arith.constant 0 : i32
    %c0_i32_0 = arith.constant 0 : i32
    return %arg0, %c0_i32 : i32, i32
  }
  func.func @transform_1(%arg0: i32) -> (i32, i32) {
    %c0_i32 = arith.constant 0 : i32
    %c0_i32_0 = arith.constant 0 : i32
    %c0_i32_1 = arith.constant 0 : i32
    return %c0_i32, %c0_i32_0 : i32, i32
  }
  func.func @transform_2(%arg0: i32) -> (i32, i32) {
    %c0_i32 = arith.constant 0 : i32
    %c0_i32_0 = arith.constant 0 : i32
    %c0_i32_1 = arith.constant 0 : i32
    return %c0_i32, %c0_i32_0 : i32, i32
  }
  func.func @transform_3(%arg0: i32) -> (i32, i32) {
    %c0_i32 = arith.constant 0 : i32
    %c0_i32_0 = arith.constant 0 : i32
    %c0_i32_1 = arith.constant 0 : i32
    return %c0_i32, %c0_i32_0 : i32, i32
  }
  func.func @transform_4(%arg0: i32) -> (i32, i32) {
    %c0_i32 = arith.constant 0 : i32
    %c0_i32_0 = arith.constant 0 : i32
    %c0_i32_1 = arith.constant 0 : i32
    return %c0_i32, %c0_i32_0 : i32, i32
  }
  func.func @transform_5(%arg0: i32) -> (i32, i32) {
    %c0_i32 = arith.constant 0 : i32
    %c0_i32_0 = arith.constant 0 : i32
    return %arg0, %c0_i32 : i32, i32
  }
}

</mosaic_0001>

<llo_original>
// kernel: tpu_custom_call.1
$region0: #{tpu_custom_call.1}
  #allocation0 [shape = 'u32[]', space=smem, size = 0x4, offset = 0x4, fixed_abs, tag = 'smem constant byte address 0x4 - core index']
  #allocation1 [shape = 'u32[144,128]{1,0:T(1,128)}', space=vmem, size = 0x12000, scoped, tag = 'internal scratch']
  %s0 = inlined_call_operand.vmem [shape: f32[16,32], index: 0, kind: input, shape index: {}]
  %s1 = inlined_call_operand.vmem [shape: f32[32,64], index: 1, kind: input, shape index: {}]
  %s2 = inlined_call_operand.vmem [shape: f32[64,4], index: 2, kind: input, shape index: {}]
  %s3 = inlined_call_operand.vmem [shape: f32[4,64], index: 3, kind: input, shape index: {}]
  %s4 = inlined_call_operand.vmem [shape: f32[1,64], index: 4, kind: input, shape index: {}]
  %s5 = inlined_call_operand.hbm [shape: f32[16,64], index: 5, kind: output, shape index: {}]
  %s6 = sld [smem:[#allocation0]]
  $region30: #{tpu_custom_call.1} parent=0
    _
  %s8 = ssub.s32 1, %s6
  %s9 = scalar_select 0, %s8, %s6
  $region1: #{tpu_custom_call.1} parent=0
    #allocation2 [shape = 'u8[8192]{0}', space=vmem, size = 0x2000, scoped, tag = 'output window, operand 0, single buffered']
    #allocation3 [shape = 's32[1]{0}', space=sflag, size = 0x4, scoped, tag = 'scoped memory for tpu_custom_call.1']
    %10 = vsyncpa [#allocation3], 0
    // Predicated region
    $region2: #{tpu_custom_call.1} parent=1 // pred_check
      _
    $region3: #{tpu_custom_call.1} parent=1 // pred_check_branch
      %12 = sbr.rel (0) target = $region5
    $region4: #{tpu_custom_call.1} parent=1 // pred_region
      _
    $region5: #{tpu_custom_call.1} parent=1 // pred_fallthru
      _
    // Predicated region
    $region6: #{tpu_custom_call.1} parent=1 // pred_check
      _
    $region7: #{tpu_custom_call.1} parent=1 // pred_check_branch
      %14 = sbr.rel (0) target = $region9
    $region8: #{tpu_custom_call.1} parent=1 // pred_region
      _
    $region9: #{tpu_custom_call.1} parent=1 // pred_fallthru
      _
    // Predicated region
    $region10: #{tpu_custom_call.1} parent=1 // pred_check
      _
    $region11: #{tpu_custom_call.1} parent=1 // pred_check_branch
      %16 = sbr.rel (0) target = $region13
    $region12: #{tpu_custom_call.1} parent=1 // pred_region
      _
    $region13: #{tpu_custom_call.1} parent=1 // pred_fallthru
      _
    // Predicated region
    $region14: #{tpu_custom_call.1} parent=1 // pred_check
      _
    $region15: #{tpu_custom_call.1} parent=1 // pred_check_branch
      %18 = sbr.rel (0) target = $region17
    $region16: #{tpu_custom_call.1} parent=1 // pred_region
      _
    $region17: #{tpu_custom_call.1} parent=1 // pred_fallthru
      _
    // Predicated region
    $region18: #{tpu_custom_call.1} parent=1 // pred_check
      _
    $region19: #{tpu_custom_call.1} parent=1 // pred_check_branch
      %20 = sbr.rel (0) target = $region21
    $region20: #{tpu_custom_call.1} parent=1 // pred_region
      _
    $region21: #{tpu_custom_call.1} parent=1 // pred_fallthru
      _
    %v21 = vld [vmem:[%s0] sm:$0xff]
    %v22 = vld [vmem:[%s0 + $0x8] sm:$0xff]
    %v23 = vld [vmem:[%s1] sm:$0xff]
    %v24 = vld [vmem:[%s1 + $0x8] sm:$0xff]
    %v25 = vld [vmem:[%s1 + $0x10] sm:$0xff]
    %v26 = vld [vmem:[%s1 + $0x18] sm:$0xff]
    %vm27 = vcmask 261120
    %v29 = vsel %vm27, %v21, 0
    %v32 = vsel %vm27, %v22, 0
    %34 = vmatprep.subr.mxu0 0.0
    %35 = vmatpush1.msra.mxu0 %v23
    %36 = vmatprep.subr.mxu0 0.0
    %37 = vmatpush1.msra.mxu0 %v24
    %38 = vmatprep.subr.mxu0 0.0
    %39 = vmatpush1.msra.mxu0 %v25
    %40 = vmatprep.subr.mxu0 0.0
    %41 = vmatpush1.msra.mxu0 %v26
    %42 = vmatprep.subr.mxu0 0.0
    %43 = vmatpush1.msra.mxu0 0.0
    %44 = vmatprep.subr.mxu0 0.0
    %45 = vmatpush1.msra.mxu0 0.0
    %46 = vmatprep.subr.mxu0 0.0
    %47 = vmatpush1.msra.mxu0 0.0
    %48 = vmatprep.subr.mxu0 0.0
    %49 = vmatpush1.msra.mxu0 0.0
    %50 = vmatprep.subr.mxu0 0.0
    %51 = vmatpush1.msra.mxu0 0.0
    %52 = vmatprep.subr.mxu0 0.0
    %53 = vmatpush1.msra.mxu0 0.0
    %54 = vmatprep.subr.mxu0 0.0
    %55 = vmatpush1.msra.mxu0 0.0
    %56 = vmatprep.subr.mxu0 0.0
    %57 = vmatpush1.msra.mxu0 0.0
    %58 = vmatprep.subr.mxu0 0.0
    %59 = vmatpush1.msra.mxu0 0.0
    %60 = vmatprep.subr.mxu0 0.0
    %61 = vmatpush1.msra.mxu0 0.0
    %62 = vmatprep.subr.mxu0 0.0
    %63 = vmatpush1.msra.mxu0 0.0
    %64 = vmatprep.subr.mxu0 0.0
    %65 = vmatpush1.msra.mxu0 0.0
    %66 = vmatprep.subr.mxu0 0.0
    %67 = vmatpush1.msra.mxu0 0.0
    %68 = vmatprep.subr.mxu0 0.0
    %69 = vmatpush1.msra.mxu0 0.0
    %70 = vmatprep.subr.mxu0 0.0
    %71 = vmatpush1.msra.mxu0 0.0
    %72 = vmatprep.subr.mxu0 0.0
    %73 = vmatpush1.msra.mxu0 0.0
    %74 = vmatprep.subr.mxu0 0.0
    %75 = vmatpush1.msra.mxu0 0.0
    %76 = vmatprep.subr.mxu0 0.0
    %77 = vmatpush1.msra.mxu0 0.0
    %78 = vmatprep.subr.mxu0 0.0
    %79 = vmatpush1.msra.mxu0 0.0
    %80 = vmatprep.subr.mxu0 0.0
    %81 = vmatpush1.msra.mxu0 0.0
    %82 = vmatprep.subr.mxu0 0.0
    %83 = vmatpush1.msra.mxu0 0.0
    %84 = vmatprep.subr.mxu0 0.0
    %85 = vmatpush1.msra.mxu0 0.0
    %86 = vmatprep.subr.mxu0 0.0
    %87 = vmatpush1.msra.mxu0 0.0
    %88 = vmatprep.subr.mxu0 0.0
    %89 = vmatpush1.msra.mxu0 0.0
    %90 = vmatprep.subr.mxu0 0.0
    %91 = vmatpush1.msra.mxu0 0.0
    %92 = vmatprep.subr.mxu0 0.0
    %93 = vmatpush1.msra.mxu0 0.0
    %94 = vmatprep.subr.mxu0 0.0
    %95 = vmatpush1.msra.mxu0 0.0
    %96 = vmatprep.subr.mxu0 0.0
    %97 = vmatpush1.msra.mxu0 0.0
    %98 = vmatprep.mubr.f32.mxu0 0.0
    %99 = vmatmul.mubr.f32.gmra.mrb[0].mxu0 %v29
    %v100 = vpop.f32.mrb[0].mxu0
    %v101 = vadd.f32 0.0, %v100
    %v102 = vpop.f32.mrb[0].mxu0
    %103 = vmatprep.mubr.f32.mxu0 0.0
    %104 = vmatmul.mubr.f32.gmra.mrb[0].mxu0 %v32
    %v105 = vpop.f32.mrb[0].mxu0
    %v106 = vadd.f32 0.0, %v105
    %v107 = vpop.f32.mrb[0].mxu0
    %108 = vdwg.mxu0
    %v109 = vld [vmem:[%s2] sm:$0xff]
    %v110 = vld [vmem:[%s2 + $0x8] sm:$0xff]
    %v111 = vld [vmem:[%s2 + $0x10] sm:$0xff]
    %v112 = vld [vmem:[%s2 + $0x18] sm:$0xff]
    %v113 = vld [vmem:[%s2 + $0x20] sm:$0xff]
    %v114 = vld [vmem:[%s2 + $0x28] sm:$0xff]
    %v115 = vld [vmem:[%s2 + $0x30] sm:$0xff]
    %v116 = vld [vmem:[%s2 + $0x38] sm:$0xff]
    %v117 = vld [vmem:[%s3] sm:$0xf]
    %v118 = vld [vmem:[%s4] sm:$0x1]
    %vm119 = vcmask 523264
    %v121 = vsel %vm119, %v101, 0
    %v124 = vsel %vm119, %v106, 0
    %126 = vmatprep.subr.mxu0 0.0
    %127 = vmatpush1.msra.mxu0 %v109
    %128 = vmatprep.subr.mxu0 0.0
    %129 = vmatpush1.msra.mxu0 %v110
    %130 = vmatprep.subr.mxu0 0.0
    %131 = vmatpush1.msra.mxu0 %v111
    %132 = vmatprep.subr.mxu0 0.0
    %133 = vmatpush1.msra.mxu0 %v112
    %134 = vmatprep.subr.mxu0 0.0
    %135 = vmatpush1.msra.mxu0 %v113
    %136 = vmatprep.subr.mxu0 0.0
    %137 = vmatpush1.msra.mxu0 %v114
    %138 = vmatprep.subr.mxu0 0.0
    %139 = vmatpush1.msra.mxu0 %v115
    %140 = vmatprep.subr.mxu0 0.0
    %141 = vmatpush1.msra.mxu0 %v116
    %142 = vmatprep.subr.mxu0 0.0
    %143 = vmatpush1.msra.mxu0 0.0
    %144 = vmatprep.subr.mxu0 0.0
    %145 = vmatpush1.msra.mxu0 0.0
    %146 = vmatprep.subr.mxu0 0.0
    %147 = vmatpush1.msra.mxu0 0.0
    %148 = vmatprep.subr.mxu0 0.0
    %149 = vmatpush1.msra.mxu0 0.0
    %150 = vmatprep.subr.mxu0 0.0
    %151 = vmatpush1.msra.mxu0 0.0
    %152 = vmatprep.subr.mxu0 0.0
    %153 = vmatpush1.msra.mxu0 0.0
    %154 = vmatprep.subr.mxu0 0.0
    %155 = vmatpush1.msra.mxu0 0.0
    %156 = vmatprep.subr.mxu0 0.0
    %157 = vmatpush1.msra.mxu0 0.0
    %158 = vmatprep.subr.mxu0 0.0
    %159 = vmatpush1.msra.mxu0 0.0
    %160 = vmatprep.subr.mxu0 0.0
    %161 = vmatpush1.msra.mxu0 0.0
    %162 = vmatprep.subr.mxu0 0.0
    %163 = vmatpush1.msra.mxu0 0.0
    %164 = vmatprep.subr.mxu0 0.0
    %165 = vmatpush1.msra.mxu0 0.0
    %166 = vmatprep.subr.mxu0 0.0
    %167 = vmatpush1.msra.mxu0 0.0
    %168 = vmatprep.subr.mxu0 0.0
    %169 = vmatpush1.msra.mxu0 0.0
    %170 = vmatprep.subr.mxu0 0.0
    %171 = vmatpush1.msra.mxu0 0.0
    %172 = vmatprep.subr.mxu0 0.0
    %173 = vmatpush1.msra.mxu0 0.0
    %174 = vmatprep.subr.mxu0 0.0
    %175 = vmatpush1.msra.mxu0 0.0
    %176 = vmatprep.subr.mxu0 0.0
    %177 = vmatpush1.msra.mxu0 0.0
    %178 = vmatprep.subr.mxu0 0.0
    %179 = vmatpush1.msra.mxu0 0.0
    %180 = vmatprep.subr.mxu0 0.0
    %181 = vmatpush1.msra.mxu0 0.0
    %182 = vmatprep.subr.mxu0 0.0
    %183 = vmatpush1.msra.mxu0 0.0
    %184 = vmatprep.subr.mxu0 0.0
    %185 = vmatpush1.msra.mxu0 0.0
    %186 = vmatprep.subr.mxu0 0.0
    %187 = vmatpush1.msra.mxu0 0.0
    %188 = vmatprep.subr.mxu0 0.0
    %189 = vmatpush1.msra.mxu0 0.0
    %190 = vmatprep.mubr.f32.mxu0 0.0
    %191 = vmatmul.mubr.f32.gmra.mrb[0].mxu0 %v121
    %v192 = vpop.f32.mrb[0].mxu0
    %v193 = vadd.f32 0.0, %v192
    %v194 = vpop.f32.mrb[0].mxu0
    %195 = vmatprep.mubr.f32.mxu0 0.0
    %196 = vmatmul.mubr.f32.gmra.mrb[0].mxu0 %v124
    %v197 = vpop.f32.mrb[0].mxu0
    %v198 = vadd.f32 0.0, %v197
    %v199 = vpop.f32.mrb[0].mxu0
    %200 = vdwg.mxu0
    %v201 = vmul.f32 %v193, 0.0625
    %v202 = vmul.f32 %v198, 0.0625
    %v203 = vmul.f32 %v101, %v101
    %v204 = vmul.f32 %v106, %v106
    %v206 = vsel %vm119, %v203, 0
    %v209 = vsel %vm119, %v204, 0
    %211 = vmatprep.subr.mxu0 0.0
    %212 = vmatpush1.msra.mxu0 %v109
    %213 = vmatprep.subr.mxu0 0.0
    %214 = vmatpush1.msra.mxu0 %v110
    %215 = vmatprep.subr.mxu0 0.0
    %216 = vmatpush1.msra.mxu0 %v111
    %217 = vmatprep.subr.mxu0 0.0
    %218 = vmatpush1.msra.mxu0 %v112
    %219 = vmatprep.subr.mxu0 0.0
    %220 = vmatpush1.msra.mxu0 %v113
    %221 = vmatprep.subr.mxu0 0.0
    %222 = vmatpush1.msra.mxu0 %v114
    %223 = vmatprep.subr.mxu0 0.0
    %224 = vmatpush1.msra.mxu0 %v115
    %225 = vmatprep.subr.mxu0 0.0
    %226 = vmatpush1.msra.mxu0 %v116
    %227 = vmatprep.subr.mxu0 0.0
    %228 = vmatpush1.msra.mxu0 0.0
    %229 = vmatprep.subr.mxu0 0.0
    %230 = vmatpush1.msra.mxu0 0.0
    %231 = vmatprep.subr.mxu0 0.0
    %232 = vmatpush1.msra.mxu0 0.0
    %233 = vmatprep.subr.mxu0 0.0
    %234 = vmatpush1.msra.mxu0 0.0
    %235 = vmatprep.subr.mxu0 0.0
    %236 = vmatpush1.msra.mxu0 0.0
    %237 = vmatprep.subr.mxu0 0.0
    %238 = vmatpush1.msra.mxu0 0.0
    %239 = vmatprep.subr.mxu0 0.0
    %240 = vmatpush1.msra.mxu0 0.0
    %241 = vmatprep.subr.mxu0 0.0
    %242 = vmatpush1.msra.mxu0 0.0
    %243 = vmatprep.subr.mxu0 0.0
    %244 = vmatpush1.msra.mxu0 0.0
    %245 = vmatprep.subr.mxu0 0.0
    %246 = vmatpush1.msra.mxu0 0.0
    %247 = vmatprep.subr.mxu0 0.0
    %248 = vmatpush1.msra.mxu0 0.0
    %249 = vmatprep.subr.mxu0 0.0
    %250 = vmatpush1.msra.mxu0 0.0
    %251 = vmatprep.subr.mxu0 0.0
    %252 = vmatpush1.msra.mxu0 0.0
    %253 = vmatprep.subr.mxu0 0.0
    %254 = vmatpush1.msra.mxu0 0.0
    %255 = vmatprep.subr.mxu0 0.0
    %256 = vmatpush1.msra.mxu0 0.0
    %257 = vmatprep.subr.mxu0 0.0
    %258 = vmatpush1.msra.mxu0 0.0
    %259 = vmatprep.subr.mxu0 0.0
    %260 = vmatpush1.msra.mxu0 0.0
    %261 = vmatprep.subr.mxu0 0.0
    %262 = vmatpush1.msra.mxu0 0.0
    %263 = vmatprep.subr.mxu0 0.0
    %264 = vmatpush1.msra.mxu0 0.0
    %265 = vmatprep.subr.mxu0 0.0
    %266 = vmatpush1.msra.mxu0 0.0
    %267 = vmatprep.subr.mxu0 0.0
    %268 = vmatpush1.msra.mxu0 0.0
    %269 = vmatprep.subr.mxu0 0.0
    %270 = vmatpush1.msra.mxu0 0.0
    %271 = vmatprep.subr.mxu0 0.0
    %272 = vmatpush1.msra.mxu0 0.0
    %273 = vmatprep.subr.mxu0 0.0
    %274 = vmatpush1.msra.mxu0 0.0
    %275 = vmatprep.mubr.f32.mxu0 0.0
    %276 = vmatmul.mubr.f32.gmra.mrb[0].mxu0 %v206
    %v277 = vpop.f32.mrb[0].mxu0
    %v278 = vadd.f32 0.0, %v277
    %v279 = vpop.f32.mrb[0].mxu0
    %280 = vmatprep.mubr.f32.mxu0 0.0
    %281 = vmatmul.mubr.f32.gmra.mrb[0].mxu0 %v209
    %v282 = vpop.f32.mrb[0].mxu0
    %v283 = vadd.f32 0.0, %v282
    %v284 = vpop.f32.mrb[0].mxu0
    %285 = vdwg.mxu0
    %v286 = vmul.f32 %v278, 0.0625
    %v287 = vmul.f32 %v283, 0.0625
    %v288 = vmul.f32 %v201, %v201
    %v289 = vmul.f32 %v202, %v202
    %v290 = vsub.f32 %v286, %v288
    %v291 = vsub.f32 %v287, %v289
    %v292 = vadd.f32 %v290, 1e-05
    %v293 = vadd.f32 %v291, 1e-05
    %v294 = vrsqrt.pop %v292
    %v295 = vrsqrt.pop %v293
    %vm296 = vcmask 31744
    %v298 = vsel %vm296, %v294, 0
    %v301 = vsel %vm296, %v295, 0
    %vm303 = vcmask 1043456
    %v305 = vsel %vm303, %v117, 0
    %307 = vmatprep.subr.mxu0 0.0
    %308 = vmatpush1.msra.mxu0 %v305
    %309 = vmatprep.subr.mxu0 0.0
    %310 = vmatpush1.msra.mxu0 0.0
    %311 = vmatprep.subr.mxu0 0.0
    %312 = vmatpush1.msra.mxu0 0.0
    %313 = vmatprep.subr.mxu0 0.0
    %314 = vmatpush1.msra.mxu0 0.0
    %315 = vmatprep.subr.mxu0 0.0
    %316 = vmatpush1.msra.mxu0 0.0
    %317 = vmatprep.subr.mxu0 0.0
    %318 = vmatpush1.msra.mxu0 0.0
    %319 = vmatprep.subr.mxu0 0.0
    %320 = vmatpush1.msra.mxu0 0.0
    %321 = vmatprep.subr.mxu0 0.0
    %322 = vmatpush1.msra.mxu0 0.0
    %323 = vmatprep.subr.mxu0 0.0
    %324 = vmatpush1.msra.mxu0 0.0
    %325 = vmatprep.subr.mxu0 0.0
    %326 = vmatpush1.msra.mxu0 0.0
    %327 = vmatprep.subr.mxu0 0.0
    %328 = vmatpush1.msra.mxu0 0.0
    %329 = vmatprep.subr.mxu0 0.0
    %330 = vmatpush1.msra.mxu0 0.0
    %331 = vmatprep.subr.mxu0 0.0
    %332 = vmatpush1.msra.mxu0 0.0
    %333 = vmatprep.subr.mxu0 0.0
    %334 = vmatpush1.msra.mxu0 0.0
    %335 = vmatprep.subr.mxu0 0.0
    %336 = vmatpush1.msra.mxu0 0.0
    %337 = vmatprep.subr.mxu0 0.0
    %338 = vmatpush1.msra.mxu0 0.0
    %339 = vmatprep.subr.mxu0 0.0
    %340 = vmatpush1.msra.mxu0 0.0
    %341 = vmatprep.subr.mxu0 0.0
    %342 = vmatpush1.msra.mxu0 0.0
    %343 = vmatprep.subr.mxu0 0.0
    %344 = vmatpush1.msra.mxu0 0.0
    %345 = vmatprep.subr.mxu0 0.0
    %346 = vmatpush1.msra.mxu0 0.0
    %347 = vmatprep.subr.mxu0 0.0
    %348 = vmatpush1.msra.mxu0 0.0
    %349 = vmatprep.subr.mxu0 0.0
    %350 = vmatpush1.msra.mxu0 0.0
    %351 = vmatprep.subr.mxu0 0.0
    %352 = vmatpush1.msra.mxu0 0.0
    %353 = vmatprep.subr.mxu0 0.0
    %354 = vmatpush1.msra.mxu0 0.0
    %355 = vmatprep.subr.mxu0 0.0
    %356 = vmatpush1.msra.mxu0 0.0
    %357 = vmatprep.subr.mxu0 0.0
    %358 = vmatpush1.msra.mxu0 0.0
    %359 = vmatprep.subr.mxu0 0.0
    %360 = vmatpush1.msra.mxu0 0.0
    %361 = vmatprep.subr.mxu0 0.0
    %362 = vmatpush1.msra.mxu0 0.0
    %363 = vmatprep.subr.mxu0 0.0
    %364 = vmatpush1.msra.mxu0 0.0
    %365 = vmatprep.subr.mxu0 0.0
    %366 = vmatpush1.msra.mxu0 0.0
    %367 = vmatprep.subr.mxu0 0.0
    %368 = vmatpush1.msra.mxu0 0.0
    %369 = vmatprep.subr.mxu0 0.0
    %370 = vmatpush1.msra.mxu0 0.0
    %371 = vmatprep.mubr.f32.mxu0 0.0
    %372 = vmatmul.mubr.f32.gmra.mrb[0].mxu0 %v298
    %v373 = vpop.f32.mrb[0].mxu0
    %v374 = vadd.f32 0.0, %v373
    %v375 = vpop.f32.mrb[0].mxu0
    %376 = vmatprep.mubr.f32.mxu0 0.0
    %377 = vmatmul.mubr.f32.gmra.mrb[0].mxu0 %v301
    %v378 = vpop.f32.mrb[0].mxu0
    %v379 = vadd.f32 0.0, %v378
    %v380 = vpop.f32.mrb[0].mxu0
    %381 = vdwg.mxu0
    %v382 = vsub.f32 0.0, %v201
    %v383 = vsub.f32 0.0, %v202
    %v384 = vmul.f32 %v382, %v294
    %v385 = vmul.f32 %v383, %v295
    %v387 = vlaneseq
    %v388 = vshrl.u32 %v387, 7
    %v389 = vsub.s32 0, %v388
    %v390 = vrot.slane %v118, %v389
    %v393 = vsel %vm296, %v384, 0
    %v396 = vsel %vm296, %v385, 0
    %398 = vmatprep.subr.mxu0 0.0
    %399 = vmatpush1.msra.mxu0 %v305
    %400 = vmatprep.subr.mxu0 0.0
    %401 = vmatpush1.msra.mxu0 0.0
    %402 = vmatprep.subr.mxu0 0.0
    %403 = vmatpush1.msra.mxu0 0.0
    %404 = vmatprep.subr.mxu0 0.0
    %405 = vmatpush1.msra.mxu0 0.0
    %406 = vmatprep.subr.mxu0 0.0
    %407 = vmatpush1.msra.mxu0 0.0
    %408 = vmatprep.subr.mxu0 0.0
    %409 = vmatpush1.msra.mxu0 0.0
    %410 = vmatprep.subr.mxu0 0.0
    %411 = vmatpush1.msra.mxu0 0.0
    %412 = vmatprep.subr.mxu0 0.0
    %413 = vmatpush1.msra.mxu0 0.0
    %414 = vmatprep.subr.mxu0 0.0
    %415 = vmatpush1.msra.mxu0 0.0
    %416 = vmatprep.subr.mxu0 0.0
    %417 = vmatpush1.msra.mxu0 0.0
    %418 = vmatprep.subr.mxu0 0.0
    %419 = vmatpush1.msra.mxu0 0.0
    %420 = vmatprep.subr.mxu0 0.0
    %421 = vmatpush1.msra.mxu0 0.0
    %422 = vmatprep.subr.mxu0 0.0
    %423 = vmatpush1.msra.mxu0 0.0
    %424 = vmatprep.subr.mxu0 0.0
    %425 = vmatpush1.msra.mxu0 0.0
    %426 = vmatprep.subr.mxu0 0.0
    %427 = vmatpush1.msra.mxu0 0.0
    %428 = vmatprep.subr.mxu0 0.0
    %429 = vmatpush1.msra.mxu0 0.0
    %430 = vmatprep.subr.mxu0 0.0
    %431 = vmatpush1.msra.mxu0 0.0
    %432 = vmatprep.subr.mxu0 0.0
    %433 = vmatpush1.msra.mxu0 0.0
    %434 = vmatprep.subr.mxu0 0.0
    %435 = vmatpush1.msra.mxu0 0.0
    %436 = vmatprep.subr.mxu0 0.0
    %437 = vmatpush1.msra.mxu0 0.0
    %438 = vmatprep.subr.mxu0 0.0
    %439 = vmatpush1.msra.mxu0 0.0
    %440 = vmatprep.subr.mxu0 0.0
    %441 = vmatpush1.msra.mxu0 0.0
    %442 = vmatprep.subr.mxu0 0.0
    %443 = vmatpush1.msra.mxu0 0.0
    %444 = vmatprep.subr.mxu0 0.0
    %445 = vmatpush1.msra.mxu0 0.0
    %446 = vmatprep.subr.mxu0 0.0
    %447 = vmatpush1.msra.mxu0 0.0
    %448 = vmatprep.subr.mxu0 0.0
    %449 = vmatpush1.msra.mxu0 0.0
    %450 = vmatprep.subr.mxu0 0.0
    %451 = vmatpush1.msra.mxu0 0.0
    %452 = vmatprep.subr.mxu0 0.0
    %453 = vmatpush1.msra.mxu0 0.0
    %454 = vmatprep.subr.mxu0 0.0
    %455 = vmatpush1.msra.mxu0 0.0
    %456 = vmatprep.subr.mxu0 0.0
    %457 = vmatpush1.msra.mxu0 0.0
    %458 = vmatprep.subr.mxu0 0.0
    %459 = vmatpush1.msra.mxu0 0.0
    %460 = vmatprep.subr.mxu0 0.0
    %461 = vmatpush1.msra.mxu0 0.0
    %462 = vmatprep.mubr.f32.mxu0 0.0
    %463 = vmatmul.mubr.f32.gmra.mrb[0].mxu0 %v393
    %v464 = vpop.f32.mrb[0].mxu0
    %v465 = vadd.f32 %v390, %v464
    %v466 = vpop.f32.mrb[0].mxu0
    %467 = vmatprep.mubr.f32.mxu0 0.0
    %468 = vmatmul.mubr.f32.gmra.mrb[0].mxu0 %v396
    %v469 = vpop.f32.mrb[0].mxu0
    %v470 = vadd.f32 %v390, %v469
    %v471 = vpop.f32.mrb[0].mxu0
    %472 = vdwg.mxu0
    %v473 = vmul.f32 %v101, %v374
    %v474 = vmul.f32 %v106, %v379
    %v475 = vadd.f32 %v473, %v465
    %v476 = vadd.f32 %v474, %v470
    %477 = vst.msk [vmem:[#allocation2] sm:$0xff] %vm119, %v475
    %478 = vst.msk [vmem:[#allocation2 + $0x8] sm:$0xff] %vm119, %v476
    // Predicated region
    $region22: #{tpu_custom_call.1} parent=1 // pred_check
      _
    $region23: #{tpu_custom_call.1} parent=1 // pred_check_branch
      %480 = sbr.rel (0) target = $region25
    $region24: #{tpu_custom_call.1} parent=1 // pred_region
      %s482 = ssub.s32 256, 256
      %483 = vsyncadd [#allocation3], %s482
      %s484 = sshll.u32 [#allocation2], 4
      %s485 = int_to_ptr.vmem [resolvable:$true] %s484
      %490 = dma.vmem_to_hbm [thread:$0]  %s485, 256, %s5, [#allocation3], 128, 128, 8
    $region25: #{tpu_custom_call.1} parent=1 // pred_fallthru
      _
    // Predicated region
    $region26: #{tpu_custom_call.1} parent=1 // pred_check
      _
    $region27: #{tpu_custom_call.1} parent=1 // pred_check_branch
      %492 = sbr.rel (0) target = $region29
    $region28: #{tpu_custom_call.1} parent=1 // pred_region
      %493 = dma.done [#allocation3], 256
    $region29: #{tpu_custom_call.1} parent=1 // pred_fallthru
      _
    %494 = vsyncpa [#allocation3], 1

</llo_original>
